<compile_context>
chip_gen: v6e
topology: v6e:2x2x1
jax: 0.10.0
libtpu: 0.0.40
codegen_flags: <defaults>
</compile_context>

<pallas_src>
import jax
import jax.numpy as jnp
from jax.experimental import pallas as pl
from jax.experimental.pallas import tpu as pltpu


def _round_up(n, m):
    return ((n + m - 1) // m) * m


def _cdiv(a, b):
    return -(-a // b)


# ---------------------------------------------------------------------------
# Kernel
# ---------------------------------------------------------------------------
def _autoencoder_kernel(x_ref, we_ref, wl_ref, wr_ref, wd_ref, z_ref, out_ref):
    """Fused 4-layer sigmoid MLP over one batch tile.

    MXU inputs stay in the stored (possibly bf16) dtype; accumulation and the
    sigmoid nonlinearity run in f32.  At padded-128 feature sizes the kernel is
    HBM/DMA-bound, so the default sigmoid lowering is kept (an EUP exp +
    pl.reciprocal(approx=True) variant only pays off if a large configuration
    ever turns MXU/VALU-bound, and it would loosen the f32 exactness check).
    """
    x = x_ref[...]
    enc = jax.nn.sigmoid(
        jnp.dot(x, we_ref[...], preferred_element_type=jnp.float32))
    z = jax.nn.sigmoid(
        jnp.dot(enc.astype(wl_ref.dtype), wl_ref[...],
                preferred_element_type=jnp.float32))
    rec = jax.nn.sigmoid(
        jnp.dot(z.astype(wr_ref.dtype), wr_ref[...],
                preferred_element_type=jnp.float32))
    out = jax.nn.sigmoid(
        jnp.dot(rec.astype(wd_ref.dtype), wd_ref[...],
                preferred_element_type=jnp.float32))
    z_ref[...] = z.astype(z_ref.dtype)
    out_ref[...] = out.astype(out_ref.dtype)


# ---------------------------------------------------------------------------
# Weight preparation (hoisted out of the per-call hot path)
# ---------------------------------------------------------------------------
def prepare_autoencoder_params(w_enc, w_lat, w_rec, w_dec, *, dtype=jnp.bfloat16):
    """One-time weight prep.

    Transposes PyTorch nn.Linear (out, in) weights to (in, out), casts to the
    I/O dtype (bf16 by default: halves HBM traffic and is MXU-native on
    v5e/v6e/v7x; pass dtype=jnp.float32 for bit-exact-vs-reference numerics),
    and zero-pads every feature dim up to a multiple of 128 so all matmul
    operands / outputs are lane-dense (unmasked vst).  Zero padding keeps
    results exact: padded activation columns (sigmoid(0)=0.5) only ever
    multiply zero-padded weight rows downstream.
    """
    w_enc = jnp.asarray(w_enc)
    w_lat = jnp.asarray(w_lat)
    w_rec = jnp.asarray(w_rec)
    w_dec = jnp.asarray(w_dec)

    encoding_dim, input_dim = w_enc.shape
    latent_dim = w_lat.shape[0]

    d_p = _round_up(input_dim, 128)
    e_p = _round_up(encoding_dim, 128)
    l_p = _round_up(latent_dim, 128)

    def _prep(w, rows, cols):
        w = w.T  # (in, out)
        if dtype is not None:
            w = w.astype(dtype)
        return jnp.pad(w, ((0, rows - w.shape[0]), (0, cols - w.shape[1])))

    params = (
        _prep(w_enc, d_p, e_p),  # (Dp, Ep)
        _prep(w_lat, e_p, l_p),  # (Ep, Lp)
        _prep(w_rec, l_p, e_p),  # (Lp, Ep)
        _prep(w_dec, e_p, d_p),  # (Ep, Dp)
    )
    dims = (input_dim, encoding_dim, latent_dim)
    return params, dims


# ---------------------------------------------------------------------------
# VMEM budgeting (generation-aware)
# ---------------------------------------------------------------------------
_X_BUFS = 3    # pl.Buffered(3) on the streamed X tile
_OUT_BUFS = 3  # pl.Buffered(3) on the streamed z / out tiles


def _vmem_caps():
    """Budget / hard-cap derived from the real per-core VMEM capacity.

    ~128 MiB on v5e/v6e, ~64 MiB on v7x.  Falls back to a v7x-safe 64 MiB if
    the query is unavailable.
    """
    try:
        cap = int(pltpu.get_tpu_info().vmem_capacity_bytes)
    except Exception:
        cap = 0
    if cap <= 0:
        cap = 64 * 1024 * 1024
    return int(0.75 * cap), int(0.90 * cap)


def _footprint_bytes(tb, d_p, e_p, l_p, io_itemsize):
    """Per-step VMEM working set with single-buffered weights."""
    w_bytes = (d_p * e_p + e_p * l_p + l_p * e_p + e_p * d_p) * io_itemsize
    x_bytes = _X_BUFS * tb * d_p * io_itemsize
    out_bytes = _OUT_BUFS * tb * (l_p + d_p) * io_itemsize
    act_bytes = tb * (e_p + l_p + e_p + d_p) * 4  # f32 intermediates
    return w_bytes + x_bytes + out_bytes + act_bytes


def _sublane_for(dtype):
    """Native sublane multiple for the I/O dtype (packed-tile height)."""
    size = jnp.dtype(dtype).itemsize
    if size >= 4:
        return 8
    if size == 2:
        return 16
    return 32


def _choose_batch_tile(batch, d_p, e_p, l_p, io_itemsize, sublane, vmem_budget):
    """Pick the batch tile.

    Aims for >= 2 grid steps whenever the batch allows (keeps the BlockSpec
    DMA pipeline busy and gives v7x's second TensorCore work via the
    "parallel" batch axis), with ~512-row tiles for HBM-roofline efficiency,
    rounded to the dtype's native sublane multiple.
    """
    if batch <= 2 * sublane:
        tb = _round_up(batch, sublane)
    else:
        n_steps = max(2, _cdiv(batch, 512))
        tb = _round_up(_cdiv(batch, n_steps), sublane)
    while tb > sublane and _footprint_bytes(tb, d_p, e_p, l_p,
                                            io_itemsize) > vmem_budget:
        tb = max(sublane, _round_up(tb // 2, sublane))
    return tb


# ---------------------------------------------------------------------------
# pallas_call construction
# ---------------------------------------------------------------------------
_PIPELINE_MODE_SUPPORTED = None  # detected on first call; cached thereafter


def _build_autoencoder_call(tb, b_pad, d_p, e_p, l_p, io_dtype, vmem_limit,
                            use_pipeline_mode):
    if use_pipeline_mode:
        stream_kw = dict(pipeline_mode=pl.Buffered(3))  # deep-pipeline streams
        weight_kw = dict(pipeline_mode=pl.Buffered(1))  # single-buffer weights
    else:
        stream_kw = {}
        weight_kw = {}

    def _weight_spec(shape):
        # Constant index_map -> the block is fetched once and stays resident.
        return pl.BlockSpec(shape, lambda i: (0, 0), **weight_kw)

    grid = (b_pad // tb,)
    return pl.pallas_call(
        _autoencoder_kernel,
        out_shape=(
            jax.ShapeDtypeStruct((b_pad, l_p), io_dtype),
            jax.ShapeDtypeStruct((b_pad, d_p), io_dtype),
        ),
        grid_spec=pltpu.PrefetchScalarGridSpec(
            num_scalar_prefetch=0,
            grid=grid,
            in_specs=[
                pl.BlockSpec((tb, d_p), lambda i: (i, 0), **stream_kw),  # X
                _weight_spec((d_p, e_p)),
                _weight_spec((e_p, l_p)),
                _weight_spec((l_p, e_p)),
                _weight_spec((e_p, d_p)),
            ],
            out_specs=[
                pl.BlockSpec((tb, l_p), lambda i: (i, 0), **stream_kw),  # z
                pl.BlockSpec((tb, d_p), lambda i: (i, 0), **stream_kw),  # out
            ],
        ),
        compiler_params=pltpu.CompilerParams(
            dimension_semantics=("parallel",),
            vmem_limit_bytes=vmem_limit),
    )


def autoencoder_forward(x, params, dims, *, batch_tile=None):
    """Fused autoencoder forward.

    Args:
      x:      (B, input_dim) activations (cast to the weight/I-O dtype).
      params: output of prepare_autoencoder_params (padded, (in,out)-layout).
      dims:   (input_dim, encoding_dim, latent_dim) true (unpadded) sizes.
    Returns:
      (z, out): (B, latent_dim), (B, input_dim) in the weight/I-O dtype.
    """
    global _PIPELINE_MODE_SUPPORTED

    we, wl, wr, wd = params
    input_dim, encoding_dim, latent_dim = dims
    d_p, e_p = we.shape
    l_p = wl.shape[1]

    io_dtype = we.dtype
    io_itemsize = jnp.dtype(io_dtype).itemsize
    sublane = _sublane_for(io_dtype)

    x = jnp.asarray(x)
    if x.dtype != io_dtype:
        x = x.astype(io_dtype)
    batch = x.shape[0]

    vmem_budget, vmem_limit_cap = _vmem_caps()

    tb = batch_tile if batch_tile is not None else _choose_batch_tile(
        batch, d_p, e_p, l_p, io_itemsize, sublane, vmem_budget)
    b_pad = _round_up(batch, tb)

    footprint = _footprint_bytes(tb, d_p, e_p, l_p, io_itemsize)
    # TODO(synk): if the single-buffered weight footprint alone exceeds the
    # VMEM budget (huge input_dim*encoding_dim), K-tile the D/E contractions on
    # a second "arbitrary" grid axis with an f32 accumulator instead of letting
    # tb collapse / vmem_limit cap below the real need.
    vmem_limit = int(min(vmem_limit_cap,
                         max(32 * 1024 * 1024, int(1.25 * footprint))))

    # Layout plumbing in the wrapper only when actually needed: aligned shapes
    # go straight into the kernel (no extra HBM round-trips).
    if b_pad != batch or d_p != input_dim:
        x_p = jnp.pad(x, ((0, b_pad - batch), (0, d_p - input_dim)))
    else:
        x_p = x

    args = (x_p, we, wl, wr, wd)
    if _PIPELINE_MODE_SUPPORTED is None or _PIPELINE_MODE_SUPPORTED:
        try:
            call = _build_autoencoder_call(
                tb, b_pad, d_p, e_p, l_p, io_dtype, vmem_limit,
                use_pipeline_mode=True)
            z_pad, y_pad = call(*args)
            _PIPELINE_MODE_SUPPORTED = True
        except Exception:
            # Older Pallas builds without BlockSpec(pipeline_mode=...): fall
            # back to default (double-buffered) pipelining.
            _PIPELINE_MODE_SUPPORTED = False
            call = _build_autoencoder_call(
                tb, b_pad, d_p, e_p, l_p, io_dtype, vmem_limit,
                use_pipeline_mode=False)
            z_pad, y_pad = call(*args)
    else:
        call = _build_autoencoder_call(
            tb, b_pad, d_p, e_p, l_p, io_dtype, vmem_limit,
            use_pipeline_mode=False)
        z_pad, y_pad = call(*args)

    z = z_pad if (b_pad == batch and l_p == latent_dim) \
        else z_pad[:batch, :latent_dim]
    out = y_pad if (b_pad == batch and d_p == input_dim) \
        else y_pad[:batch, :input_dim]
    return z, out


# ---------------------------------------------------------------------------
# Reference + self-test
# ---------------------------------------------------------------------------
def _init_linear_weight(key, out_features, in_features):
    """Deterministic init mimicking nn.Linear default: U(-1/sqrt(in), 1/sqrt(in))."""
    bound = 1.0 / jnp.sqrt(jnp.float32(in_features))
    return jax.random.uniform(
        key, (out_features, in_features), dtype=jnp.float32,
        minval=-bound, maxval=bound)


def _reference_forward(x, w_enc, w_lat, w_rec, w_dec):
    """Plain-JAX reference matching the PyTorch module semantics."""
    enc = jax.nn.sigmoid(x @ w_enc.T)
    z = jax.nn.sigmoid(enc @ w_lat.T)
    rec = jax.nn.sigmoid(z @ w_rec.T)
    out = jax.nn.sigmoid(rec @ w_dec.T)
    return z, out


if __name__ == "__main__":
    # Small shapes consistent with the module: Linear layers over a flat feature dim.
    batch = 8
    input_dim = 32
    encoding_dim = 16
    latent_dim = 8

    root = jax.random.PRNGKey(0)
    kx, k1, k2, k3, k4 = jax.random.split(root, 5)

    x = jax.random.normal(kx, (batch, input_dim), dtype=jnp.float32)
    w_enc = _init_linear_weight(k1, encoding_dim, input_dim)
    w_lat = _init_linear_weight(k2, latent_dim, encoding_dim)
    w_rec = _init_linear_weight(k3, encoding_dim, latent_dim)
    w_dec = _init_linear_weight(k4, input_dim, encoding_dim)

    z_ref, out_ref = _reference_forward(x, w_enc, w_lat, w_rec, w_dec)

    # f32 I/O path: matches the PyTorch module semantics (up to matmul assoc.).
    params32, dims = prepare_autoencoder_params(
        w_enc, w_lat, w_rec, w_dec, dtype=jnp.float32)
    z32, out32 = autoencoder_forward(x, params32, dims)
    z32, out32 = jax.block_until_ready((z32, out32))
    assert z32.shape == (batch, latent_dim)
    assert out32.shape == (batch, input_dim)
    assert jnp.allclose(z32, z_ref, atol=1e-5, rtol=1e-5)
    assert jnp.allclose(out32, out_ref, atol=1e-5, rtol=1e-5)

    # Default bf16 I/O path (halved HBM traffic, bf16-native MXU); looser check.
    params16, _ = prepare_autoencoder_params(w_enc, w_lat, w_rec, w_dec)
    z16, out16 = autoencoder_forward(x, params16, dims)
    z16, out16 = jax.block_until_ready((z16, out16))
    assert z16.shape == (batch, latent_dim)
    assert out16.shape == (batch, input_dim)
    assert jnp.allclose(z16.astype(jnp.float32), z_ref, atol=3e-2)
    assert jnp.allclose(out16.astype(jnp.float32), out_ref, atol=3e-2)

    print("KERNEL_OK")
</pallas_src>

<mosaic_0001>
module attributes {stable_mosaic.version = 11 : i64} {
  func.func @_autoencoder_kernel(%arg0: i32, %arg1: memref<8x128xf32, #tpu.memory_space<vmem>>, %arg2: memref<128x128xf32, #tpu.memory_space<vmem>>, %arg3: memref<128x128xf32, #tpu.memory_space<vmem>>, %arg4: memref<128x128xf32, #tpu.memory_space<vmem>>, %arg5: memref<128x128xf32, #tpu.memory_space<vmem>>, %arg6: memref<8x128xf32, #tpu.memory_space<vmem>>, %arg7: memref<8x128xf32, #tpu.memory_space<vmem>>) attributes {dimension_semantics = [#tpu.dimension_semantics<parallel>], iteration_bounds = array<i64: 1>, scalar_prefetch = 0 : i64, scratch_operands = 0 : i64, tpu.core_type = #tpu.core_type<tc>, window_params = [{transform_indices = @transform_0, window_bounds = array<i64: 8, 128>}, {pipeline_mode = #tpu.pipeline_mode<synchronous>, transform_indices = @transform_1, window_bounds = array<i64: 128, 128>}, {pipeline_mode = #tpu.pipeline_mode<synchronous>, transform_indices = @transform_2, window_bounds = array<i64: 128, 128>}, {pipeline_mode = #tpu.pipeline_mode<synchronous>, transform_indices = @transform_3, window_bounds = array<i64: 128, 128>}, {pipeline_mode = #tpu.pipeline_mode<synchronous>, transform_indices = @transform_4, window_bounds = array<i64: 128, 128>}, {transform_indices = @transform_5, window_bounds = array<i64: 8, 128>}, {transform_indices = @transform_6, window_bounds = array<i64: 8, 128>}]} {
    %c0 = arith.constant 0 : index
    %c0_0 = arith.constant 0 : index
    %0 = vector.load %arg1[%c0, %c0_0] : memref<8x128xf32, #tpu.memory_space<vmem>>, vector<8x128xf32>
    %c0_1 = arith.constant 0 : index
    %c0_2 = arith.constant 0 : index
    %1 = vector.load %arg2[%c0_1, %c0_2] : memref<128x128xf32, #tpu.memory_space<vmem>>, vector<128x128xf32>
    %cst = arith.constant dense<0.000000e+00> : vector<8x128xf32>
    %2 = tpu.matmul %0, %1, %cst {dimension_numbers = #tpu.dot_dimension_numbers<[1], [0], [0], [1], [0, 0, 1, 1], [], []>} : vector<8x128xf32>, vector<128x128xf32>, vector<8x128xf32> -> vector<8x128xf32>
    %3 = arith.negf %2 : vector<8x128xf32>
    %4 = math.exp %3 : vector<8x128xf32>
    %cst_3 = arith.constant 1.000000e+00 : f32
    %5 = vector.broadcast %cst_3 : f32 to vector<8x128xf32>
    %6 = arith.addf %5, %4 : vector<8x128xf32>
    %7 = arith.divf %5, %6 : vector<8x128xf32>
    %c0_4 = arith.constant 0 : index
    %c0_5 = arith.constant 0 : index
    %8 = vector.load %arg3[%c0_4, %c0_5] : memref<128x128xf32, #tpu.memory_space<vmem>>, vector<128x128xf32>
    %cst_6 = arith.constant dense<0.000000e+00> : vector<8x128xf32>
    %9 = tpu.matmul %7, %8, %cst_6 {dimension_numbers = #tpu.dot_dimension_numbers<[1], [0], [0], [1], [0, 0, 1, 1], [], []>} : vector<8x128xf32>, vector<128x128xf32>, vector<8x128xf32> -> vector<8x128xf32>
    %10 = arith.negf %9 : vector<8x128xf32>
    %11 = math.exp %10 : vector<8x128xf32>
    %cst_7 = arith.constant 1.000000e+00 : f32
    %12 = vector.broadcast %cst_7 : f32 to vector<8x128xf32>
    %13 = arith.addf %12, %11 : vector<8x128xf32>
    %14 = arith.divf %12, %13 : vector<8x128xf32>
    %c0_8 = arith.constant 0 : index
    %c0_9 = arith.constant 0 : index
    %15 = vector.load %arg4[%c0_8, %c0_9] : memref<128x128xf32, #tpu.memory_space<vmem>>, vector<128x128xf32>
    %cst_10 = arith.constant dense<0.000000e+00> : vector<8x128xf32>
    %16 = tpu.matmul %14, %15, %cst_10 {dimension_numbers = #tpu.dot_dimension_numbers<[1], [0], [0], [1], [0, 0, 1, 1], [], []>} : vector<8x128xf32>, vector<128x128xf32>, vector<8x128xf32> -> vector<8x128xf32>
    %17 = arith.negf %16 : vector<8x128xf32>
    %18 = math.exp %17 : vector<8x128xf32>
    %cst_11 = arith.constant 1.000000e+00 : f32
    %19 = vector.broadcast %cst_11 : f32 to vector<8x128xf32>
    %20 = arith.addf %19, %18 : vector<8x128xf32>
    %21 = arith.divf %19, %20 : vector<8x128xf32>
    %c0_12 = arith.constant 0 : index
    %c0_13 = arith.constant 0 : index
    %22 = vector.load %arg5[%c0_12, %c0_13] : memref<128x128xf32, #tpu.memory_space<vmem>>, vector<128x128xf32>
    %cst_14 = arith.constant dense<0.000000e+00> : vector<8x128xf32>
    %23 = tpu.matmul %21, %22, %cst_14 {dimension_numbers = #tpu.dot_dimension_numbers<[1], [0], [0], [1], [0, 0, 1, 1], [], []>} : vector<8x128xf32>, vector<128x128xf32>, vector<8x128xf32> -> vector<8x128xf32>
    %24 = arith.negf %23 : vector<8x128xf32>
    %25 = math.exp %24 : vector<8x128xf32>
    %cst_15 = arith.constant 1.000000e+00 : f32
    %26 = vector.broadcast %cst_15 : f32 to vector<8x128xf32>
    %27 = arith.addf %26, %25 : vector<8x128xf32>
    %28 = arith.divf %26, %27 : vector<8x128xf32>
    %c0_16 = arith.constant 0 : index
    %c0_17 = arith.constant 0 : index
    %29 = vector.load %arg6[%c0_16, %c0_17] : memref<8x128xf32, #tpu.memory_space<vmem>>, vector<8x128xf32>
    tpu.vector_store %arg6[%c0_16, %c0_17], %14 {strides = array<i32>} : memref<8x128xf32, #tpu.memory_space<vmem>>, vector<8x128xf32>,
    %c0_18 = arith.constant 0 : index
    %c0_19 = arith.constant 0 : index
    %30 = vector.load %arg7[%c0_18, %c0_19] : memref<8x128xf32, #tpu.memory_space<vmem>>, vector<8x128xf32>
    tpu.vector_store %arg7[%c0_18, %c0_19], %28 {strides = array<i32>} : memref<8x128xf32, #tpu.memory_space<vmem>>, vector<8x128xf32>,
    return
  }
  func.func @transform_0(%arg0: i32) -> (i32, i32) {
    %c0_i32 = arith.constant 0 : i32
    %c0_i32_0 = arith.constant 0 : i32
    return %arg0, %c0_i32 : i32, i32
  }
  func.func @transform_1(%arg0: i32) -> (i32, i32) {
    %c0_i32 = arith.constant 0 : i32
    %c0_i32_0 = arith.constant 0 : i32
    %c0_i32_1 = arith.constant 0 : i32
    return %c0_i32, %c0_i32_0 : i32, i32
  }
  func.func @transform_2(%arg0: i32) -> (i32, i32) {
    %c0_i32 = arith.constant 0 : i32
    %c0_i32_0 = arith.constant 0 : i32
    %c0_i32_1 = arith.constant 0 : i32
    return %c0_i32, %c0_i32_0 : i32, i32
  }
  func.func @transform_3(%arg0: i32) -> (i32, i32) {
    %c0_i32 = arith.constant 0 : i32
    %c0_i32_0 = arith.constant 0 : i32
    %c0_i32_1 = arith.constant 0 : i32
    return %c0_i32, %c0_i32_0 : i32, i32
  }
  func.func @transform_4(%arg0: i32) -> (i32, i32) {
    %c0_i32 = arith.constant 0 : i32
    %c0_i32_0 = arith.constant 0 : i32
    %c0_i32_1 = arith.constant 0 : i32
    return %c0_i32, %c0_i32_0 : i32, i32
  }
  func.func @transform_5(%arg0: i32) -> (i32, i32) {
    %c0_i32 = arith.constant 0 : i32
    %c0_i32_0 = arith.constant 0 : i32
    return %arg0, %c0_i32 : i32, i32
  }
  func.func @transform_6(%arg0: i32) -> (i32, i32) {
    %c0_i32 = arith.constant 0 : i32
    %c0_i32_0 = arith.constant 0 : i32
    return %arg0, %c0_i32 : i32, i32
  }
}

</mosaic_0001>

<llo_original>
// kernel: tpu_custom_call.1
$region0: #{tpu_custom_call.1}
  #allocation0 [shape = 'u32[]', space=smem, size = 0x4, offset = 0x4, fixed_abs, tag = 'smem constant byte address 0x4 - core index']
  #allocation1 [shape = 'u32[144,128]{1,0:T(1,128)}', space=vmem, size = 0x12000, scoped, tag = 'internal scratch']
  %s0 = inlined_call_operand.hbm [shape: f32[8,128], index: 0, kind: input, shape index: {}]
  %s1 = inlined_call_operand.hbm [shape: f32[128,128], index: 1, kind: input, shape index: {}]
  %s2 = inlined_call_operand.hbm [shape: f32[128,128], index: 2, kind: input, shape index: {}]
  %s3 = inlined_call_operand.hbm [shape: f32[128,128], index: 3, kind: input, shape index: {}]
  %s4 = inlined_call_operand.hbm [shape: f32[128,128], index: 4, kind: input, shape index: {}]
  %s5 = inlined_call_operand.hbm [shape: f32[8,128], index: 5, kind: output, shape index: {0}]
  %s6 = inlined_call_operand.hbm [shape: f32[8,128], index: 6, kind: output, shape index: {1}]
  %7 = xla_tuple %s5, %s6
  %s8 = sld [smem:[#allocation0]]
  $region58: #{tpu_custom_call.1} parent=0
    _
  %s10 = ssub.s32 1, %s8
  %s11 = scalar_select 0, %s10, %s8
  $region1: #{tpu_custom_call.1} parent=0
    #allocation2 [shape = 'u8[4096]{0}', space=vmem, size = 0x1000, scoped, tag = 'input window, operand 0, single buffered']
    #allocation3 [shape = 's32[1]{0}', space=sflag, size = 0x4, scoped, tag = 'scoped memory for tpu_custom_call.1']
    #allocation4 [shape = 's32[1]{0}', space=sflag, size = 0x4, scoped, tag = 'scoped memory for tpu_custom_call.1']
    #allocation5 [shape = 'u8[65536]{0}', space=vmem, size = 0x10000, scoped, tag = 'input window, operand 1, single buffered']
    #allocation6 [shape = 's32[1]{0}', space=sflag, size = 0x4, scoped, tag = 'scoped memory for tpu_custom_call.1']
    #allocation7 [shape = 'u8[65536]{0}', space=vmem, size = 0x10000, scoped, tag = 'input window, operand 2, single buffered']
    #allocation8 [shape = 'u8[65536]{0}', space=vmem, size = 0x10000, scoped, tag = 'input window, operand 3, single buffered']
    #allocation9 [shape = 's32[1]{0}', space=sflag, size = 0x4, scoped, tag = 'scoped memory for tpu_custom_call.1']
    #allocation10 [shape = 'u8[65536]{0}', space=vmem, size = 0x10000, scoped, tag = 'input window, operand 4, single buffered']
    #allocation11 [shape = 'u8[4096]{0}', space=vmem, size = 0x1000, scoped, tag = 'output window, operand 0, single buffered']
    #allocation12 [shape = 'u8[4096]{0}', space=vmem, size = 0x1000, scoped, tag = 'output window, operand 1, single buffered']
    #allocation13 [shape = 's32[1]{0}', space=sflag, size = 0x4, scoped, tag = 'scoped memory for tpu_custom_call.1']
    %12 = vsyncpa [#allocation3], 0
    %13 = vsyncpa [#allocation6], 0
    %14 = vsyncpa [#allocation9], 0
    %15 = vsyncpa [#allocation4], 0
    %16 = vsyncpa [#allocation13], 0
    // Predicated region
    $region2: #{tpu_custom_call.1} parent=1 // pred_check
      _
    $region3: #{tpu_custom_call.1} parent=1 // pred_check_branch
      %18 = sbr.rel (0) target = $region5
    $region4: #{tpu_custom_call.1} parent=1 // pred_region
      %s20 = ssub.s32 128, 128
      %21 = vsyncadd [#allocation3], %s20
      %s23 = sshll.u32 [#allocation2], 4
      %s24 = int_to_ptr.vmem [resolvable:$true] %s23
      %26 = dma.hbm_to_vmem [thread:$0]  %s0, 128, %s24, [#allocation3]
    $region5: #{tpu_custom_call.1} parent=1 // pred_fallthru
      _
    // Predicated region
    $region6: #{tpu_custom_call.1} parent=1 // pred_check
      _
    $region7: #{tpu_custom_call.1} parent=1 // pred_check_branch
      %28 = sbr.rel (0) target = $region9
    $region8: #{tpu_custom_call.1} parent=1 // pred_region
      %s30 = ssub.s32 2048, 2048
      %31 = vsyncadd [#allocation6], %s30
      %s32 = sshll.u32 [#allocation5], 4
      %s33 = int_to_ptr.vmem [resolvable:$true] %s32
      %38 = dma.hbm_to_vmem [thread:$0]  %s1, 2048, %s33, [#allocation6], 128, 128, 8
    $region9: #{tpu_custom_call.1} parent=1 // pred_fallthru
      _
    // Predicated region
    $region10: #{tpu_custom_call.1} parent=1 // pred_check
      _
    $region11: #{tpu_custom_call.1} parent=1 // pred_check_branch
      %40 = sbr.rel (0) target = $region13
    $region12: #{tpu_custom_call.1} parent=1 // pred_region
      %s42 = ssub.s32 2048, 2048
      %43 = vsyncadd [#allocation6], %s42
      %s44 = sshll.u32 [#allocation7], 4
      %s45 = int_to_ptr.vmem [resolvable:$true] %s44
      %50 = dma.hbm_to_vmem [thread:$0]  %s2, 2048, %s45, [#allocation6], 128, 128, 8
    $region13: #{tpu_custom_call.1} parent=1 // pred_fallthru
      _
    // Predicated region
    $region14: #{tpu_custom_call.1} parent=1 // pred_check
      _
    $region15: #{tpu_custom_call.1} parent=1 // pred_check_branch
      %52 = sbr.rel (0) target = $region17
    $region16: #{tpu_custom_call.1} parent=1 // pred_region
      %s54 = ssub.s32 2048, 2048
      %55 = vsyncadd [#allocation9], %s54
      %s56 = sshll.u32 [#allocation8], 4
      %s57 = int_to_ptr.vmem [resolvable:$true] %s56
      %62 = dma.hbm_to_vmem [thread:$0]  %s3, 2048, %s57, [#allocation9], 128, 128, 8
    $region17: #{tpu_custom_call.1} parent=1 // pred_fallthru
      _
    // Predicated region
    $region18: #{tpu_custom_call.1} parent=1 // pred_check
      _
    $region19: #{tpu_custom_call.1} parent=1 // pred_check_branch
      %64 = sbr.rel (0) target = $region21
    $region20: #{tpu_custom_call.1} parent=1 // pred_region
      %s66 = ssub.s32 2048, 2048
      %67 = vsyncadd [#allocation9], %s66
      %s68 = sshll.u32 [#allocation10], 4
      %s69 = int_to_ptr.vmem [resolvable:$true] %s68
      %74 = dma.hbm_to_vmem [thread:$0]  %s4, 2048, %s69, [#allocation9], 128, 128, 8
    $region21: #{tpu_custom_call.1} parent=1 // pred_fallthru
      _
    // Predicated region
    $region22: #{tpu_custom_call.1} parent=1 // pred_check
      _
    $region23: #{tpu_custom_call.1} parent=1 // pred_check_branch
      %76 = sbr.rel (0) target = $region25
    $region24: #{tpu_custom_call.1} parent=1 // pred_region
      %77 = dma.done [#allocation3], 128
    $region25: #{tpu_custom_call.1} parent=1 // pred_fallthru
      _
    // Predicated region
    $region26: #{tpu_custom_call.1} parent=1 // pred_check
      _
    $region27: #{tpu_custom_call.1} parent=1 // pred_check_branch
      %79 = sbr.rel (0) target = $region29
    $region28: #{tpu_custom_call.1} parent=1 // pred_region
      %80 = dma.done [#allocation6], 2048
    $region29: #{tpu_custom_call.1} parent=1 // pred_fallthru
      _
    // Predicated region
    $region30: #{tpu_custom_call.1} parent=1 // pred_check
      _
    $region31: #{tpu_custom_call.1} parent=1 // pred_check_branch
      %82 = sbr.rel (0) target = $region33
    $region32: #{tpu_custom_call.1} parent=1 // pred_region
      %83 = dma.done [#allocation6], 2048
    $region33: #{tpu_custom_call.1} parent=1 // pred_fallthru
      _
    // Predicated region
    $region34: #{tpu_custom_call.1} parent=1 // pred_check
      _
    $region35: #{tpu_custom_call.1} parent=1 // pred_check_branch
      %85 = sbr.rel (0) target = $region37
    $region36: #{tpu_custom_call.1} parent=1 // pred_region
      %86 = dma.done [#allocation9], 2048
    $region37: #{tpu_custom_call.1} parent=1 // pred_fallthru
      _
    // Predicated region
    $region38: #{tpu_custom_call.1} parent=1 // pred_check
      _
    $region39: #{tpu_custom_call.1} parent=1 // pred_check_branch
      %88 = sbr.rel (0) target = $region41
    $region40: #{tpu_custom_call.1} parent=1 // pred_region
      %89 = dma.done [#allocation9], 2048
    $region41: #{tpu_custom_call.1} parent=1 // pred_fallthru
      _
    %v90 = vld [vmem:[#allocation2] sm:$0xff]
    %v91 = vld [vmem:[#allocation5] sm:$0xff]
    %v92 = vld [vmem:[#allocation5 + $0x8] sm:$0xff]
    %v93 = vld [vmem:[#allocation5 + $0x10] sm:$0xff]
    %v94 = vld [vmem:[#allocation5 + $0x18] sm:$0xff]
    %v95 = vld [vmem:[#allocation5 + $0x20] sm:$0xff]
    %v96 = vld [vmem:[#allocation5 + $0x28] sm:$0xff]
    %v97 = vld [vmem:[#allocation5 + $0x30] sm:$0xff]
    %v98 = vld [vmem:[#allocation5 + $0x38] sm:$0xff]
    %v99 = vld [vmem:[#allocation5 + $0x40] sm:$0xff]
    %v100 = vld [vmem:[#allocation5 + $0x48] sm:$0xff]
    %v101 = vld [vmem:[#allocation5 + $0x50] sm:$0xff]
    %v102 = vld [vmem:[#allocation5 + $0x58] sm:$0xff]
    %v103 = vld [vmem:[#allocation5 + $0x60] sm:$0xff]
    %v104 = vld [vmem:[#allocation5 + $0x68] sm:$0xff]
    %v105 = vld [vmem:[#allocation5 + $0x70] sm:$0xff]
    %v106 = vld [vmem:[#allocation5 + $0x78] sm:$0xff]
    %107 = vmatprep.subr.mxu0 0.0
    %108 = vmatpush1.msra.mxu0 %v106
    %109 = vmatprep.subr.mxu0 0.0
    %110 = vmatpush1.msra.mxu0 %v105
    %111 = vmatprep.subr.mxu0 0.0
    %112 = vmatpush1.msra.mxu0 %v104
    %113 = vmatprep.subr.mxu0 0.0
    %114 = vmatpush1.msra.mxu0 %v103
    %115 = vmatprep.subr.mxu0 0.0
    %116 = vmatpush1.msra.mxu0 %v102
    %117 = vmatprep.subr.mxu0 0.0
    %118 = vmatpush1.msra.mxu0 %v101
    %119 = vmatprep.subr.mxu0 0.0
    %120 = vmatpush1.msra.mxu0 %v100
    %121 = vmatprep.subr.mxu0 0.0
    %122 = vmatpush1.msra.mxu0 %v99
    %123 = vmatprep.subr.mxu0 0.0
    %124 = vmatpush1.msra.mxu0 %v98
    %125 = vmatprep.subr.mxu0 0.0
    %126 = vmatpush1.msra.mxu0 %v97
    %127 = vmatprep.subr.mxu0 0.0
    %128 = vmatpush1.msra.mxu0 %v96
    %129 = vmatprep.subr.mxu0 0.0
    %130 = vmatpush1.msra.mxu0 %v95
    %131 = vmatprep.subr.mxu0 0.0
    %132 = vmatpush1.msra.mxu0 %v94
    %133 = vmatprep.subr.mxu0 0.0
    %134 = vmatpush1.msra.mxu0 %v93
    %135 = vmatprep.subr.mxu0 0.0
    %136 = vmatpush1.msra.mxu0 %v92
    %137 = vmatprep.subr.mxu0 0.0
    %138 = vmatpush1.msra.mxu0 %v91
    %139 = vmatprep.subr.mxu0 0.0
    %140 = vmatpush2.msra.mxu0 0.0
    %141 = vmatprep.subr.mxu0 0.0
    %142 = vmatpush2.msra.mxu0 0.0
    %143 = vmatprep.subr.mxu0 0.0
    %144 = vmatpush2.msra.mxu0 0.0
    %145 = vmatprep.subr.mxu0 0.0
    %146 = vmatpush2.msra.mxu0 0.0
    %147 = vmatprep.subr.mxu0 0.0
    %148 = vmatpush2.msra.mxu0 0.0
    %149 = vmatprep.subr.mxu0 0.0
    %150 = vmatpush2.msra.mxu0 0.0
    %151 = vmatprep.subr.mxu0 0.0
    %152 = vmatpush2.msra.mxu0 0.0
    %153 = vmatprep.subr.mxu0 0.0
    %154 = vmatpush2.msra.mxu0 0.0
    %155 = vmatprep.subr.mxu0 0.0
    %156 = vmatpush2.msra.mxu0 0.0
    %157 = vmatprep.subr.mxu0 0.0
    %158 = vmatpush2.msra.mxu0 0.0
    %159 = vmatprep.subr.mxu0 0.0
    %160 = vmatpush2.msra.mxu0 0.0
    %161 = vmatprep.subr.mxu0 0.0
    %162 = vmatpush2.msra.mxu0 0.0
    %163 = vmatprep.subr.mxu0 0.0
    %164 = vmatpush2.msra.mxu0 0.0
    %165 = vmatprep.subr.mxu0 0.0
    %166 = vmatpush2.msra.mxu0 0.0
    %167 = vmatprep.subr.mxu0 0.0
    %168 = vmatpush2.msra.mxu0 0.0
    %169 = vmatprep.subr.mxu0 0.0
    %170 = vmatpush2.msra.mxu0 0.0
    %171 = vmatprep.mubr.f32.mxu0 0.0
    %172 = vmatmul.mubr.f32.gmra.mxu0 %v90
    %v173 = vpop.f32.mrf.mxu0
    %v174 = vadd.f32 0.0, %v173
    %v175 = vpop.f32.mrf.mxu0
    %176 = vdwg.mxu0
    %v177 = vxor.u32 %v174, 2147483648
    %v178 = vmul.f32 %v177, 1.442695
    %v179 = vpow.pop %v178
    %v180 = vadd.f32 %v179, 1.0
    %v181 = vrcp.pop %v180
    %v182 = vmul.f32 1.0, %v181
    %v183 = vld [vmem:[#allocation7] sm:$0xff]
    %v184 = vld [vmem:[#allocation7 + $0x8] sm:$0xff]
    %v185 = vld [vmem:[#allocation7 + $0x10] sm:$0xff]
    %v186 = vld [vmem:[#allocation7 + $0x18] sm:$0xff]
    %v187 = vld [vmem:[#allocation7 + $0x20] sm:$0xff]
    %v188 = vld [vmem:[#allocation7 + $0x28] sm:$0xff]
    %v189 = vld [vmem:[#allocation7 + $0x30] sm:$0xff]
    %v190 = vld [vmem:[#allocation7 + $0x38] sm:$0xff]
    %v191 = vld [vmem:[#allocation7 + $0x40] sm:$0xff]
    %v192 = vld [vmem:[#allocation7 + $0x48] sm:$0xff]
    %v193 = vld [vmem:[#allocation7 + $0x50] sm:$0xff]
    %v194 = vld [vmem:[#allocation7 + $0x58] sm:$0xff]
    %v195 = vld [vmem:[#allocation7 + $0x60] sm:$0xff]
    %v196 = vld [vmem:[#allocation7 + $0x68] sm:$0xff]
    %v197 = vld [vmem:[#allocation7 + $0x70] sm:$0xff]
    %v198 = vld [vmem:[#allocation7 + $0x78] sm:$0xff]
    %199 = vmatprep.subr.mxu0 0.0
    %200 = vmatpush1.msra.mxu0 %v198
    %201 = vmatprep.subr.mxu0 0.0
    %202 = vmatpush1.msra.mxu0 %v197
    %203 = vmatprep.subr.mxu0 0.0
    %204 = vmatpush1.msra.mxu0 %v196
    %205 = vmatprep.subr.mxu0 0.0
    %206 = vmatpush1.msra.mxu0 %v195
    %207 = vmatprep.subr.mxu0 0.0
    %208 = vmatpush1.msra.mxu0 %v194
    %209 = vmatprep.subr.mxu0 0.0
    %210 = vmatpush1.msra.mxu0 %v193
    %211 = vmatprep.subr.mxu0 0.0
    %212 = vmatpush1.msra.mxu0 %v192
    %213 = vmatprep.subr.mxu0 0.0
    %214 = vmatpush1.msra.mxu0 %v191
    %215 = vmatprep.subr.mxu0 0.0
    %216 = vmatpush1.msra.mxu0 %v190
    %217 = vmatprep.subr.mxu0 0.0
    %218 = vmatpush1.msra.mxu0 %v189
    %219 = vmatprep.subr.mxu0 0.0
    %220 = vmatpush1.msra.mxu0 %v188
    %221 = vmatprep.subr.mxu0 0.0
    %222 = vmatpush1.msra.mxu0 %v187
    %223 = vmatprep.subr.mxu0 0.0
    %224 = vmatpush1.msra.mxu0 %v186
    %225 = vmatprep.subr.mxu0 0.0
    %226 = vmatpush1.msra.mxu0 %v185
    %227 = vmatprep.subr.mxu0 0.0
    %228 = vmatpush1.msra.mxu0 %v184
    %229 = vmatprep.subr.mxu0 0.0
    %230 = vmatpush1.msra.mxu0 %v183
    %231 = vmatprep.subr.mxu0 0.0
    %232 = vmatpush2.msra.mxu0 0.0
    %233 = vmatprep.subr.mxu0 0.0
    %234 = vmatpush2.msra.mxu0 0.0
    %235 = vmatprep.subr.mxu0 0.0
    %236 = vmatpush2.msra.mxu0 0.0
    %237 = vmatprep.subr.mxu0 0.0
    %238 = vmatpush2.msra.mxu0 0.0
    %239 = vmatprep.subr.mxu0 0.0
    %240 = vmatpush2.msra.mxu0 0.0
    %241 = vmatprep.subr.mxu0 0.0
    %242 = vmatpush2.msra.mxu0 0.0
    %243 = vmatprep.subr.mxu0 0.0
    %244 = vmatpush2.msra.mxu0 0.0
    %245 = vmatprep.subr.mxu0 0.0
    %246 = vmatpush2.msra.mxu0 0.0
    %247 = vmatprep.subr.mxu0 0.0
    %248 = vmatpush2.msra.mxu0 0.0
    %249 = vmatprep.subr.mxu0 0.0
    %250 = vmatpush2.msra.mxu0 0.0
    %251 = vmatprep.subr.mxu0 0.0
    %252 = vmatpush2.msra.mxu0 0.0
    %253 = vmatprep.subr.mxu0 0.0
    %254 = vmatpush2.msra.mxu0 0.0
    %255 = vmatprep.subr.mxu0 0.0
    %256 = vmatpush2.msra.mxu0 0.0
    %257 = vmatprep.subr.mxu0 0.0
    %258 = vmatpush2.msra.mxu0 0.0
    %259 = vmatprep.subr.mxu0 0.0
    %260 = vmatpush2.msra.mxu0 0.0
    %261 = vmatprep.subr.mxu0 0.0
    %262 = vmatpush2.msra.mxu0 0.0
    %263 = vmatprep.mubr.f32.mxu0 0.0
    %264 = vmatmul.mubr.f32.gmra.mxu0 %v182
    %v265 = vpop.f32.mrf.mxu0
    %v266 = vadd.f32 0.0, %v265
    %v267 = vpop.f32.mrf.mxu0
    %268 = vdwg.mxu0
    %v269 = vxor.u32 %v266, 2147483648
    %v270 = vmul.f32 %v269, 1.442695
    %v271 = vpow.pop %v270
    %v272 = vadd.f32 %v271, 1.0
    %v273 = vrcp.pop %v272
    %v274 = vmul.f32 1.0, %v273
    %v275 = vld [vmem:[#allocation8] sm:$0xff]
    %v276 = vld [vmem:[#allocation8 + $0x8] sm:$0xff]
    %v277 = vld [vmem:[#allocation8 + $0x10] sm:$0xff]
    %v278 = vld [vmem:[#allocation8 + $0x18] sm:$0xff]
    %v279 = vld [vmem:[#allocation8 + $0x20] sm:$0xff]
    %v280 = vld [vmem:[#allocation8 + $0x28] sm:$0xff]
    %v281 = vld [vmem:[#allocation8 + $0x30] sm:$0xff]
    %v282 = vld [vmem:[#allocation8 + $0x38] sm:$0xff]
    %v283 = vld [vmem:[#allocation8 + $0x40] sm:$0xff]
    %v284 = vld [vmem:[#allocation8 + $0x48] sm:$0xff]
    %v285 = vld [vmem:[#allocation8 + $0x50] sm:$0xff]
    %v286 = vld [vmem:[#allocation8 + $0x58] sm:$0xff]
    %v287 = vld [vmem:[#allocation8 + $0x60] sm:$0xff]
    %v288 = vld [vmem:[#allocation8 + $0x68] sm:$0xff]
    %v289 = vld [vmem:[#allocation8 + $0x70] sm:$0xff]
    %v290 = vld [vmem:[#allocation8 + $0x78] sm:$0xff]
    %291 = vmatprep.subr.mxu0 0.0
    %292 = vmatpush1.msra.mxu0 %v290
    %293 = vmatprep.subr.mxu0 0.0
    %294 = vmatpush1.msra.mxu0 %v289
    %295 = vmatprep.subr.mxu0 0.0
    %296 = vmatpush1.msra.mxu0 %v288
    %297 = vmatprep.subr.mxu0 0.0
    %298 = vmatpush1.msra.mxu0 %v287
    %299 = vmatprep.subr.mxu0 0.0
    %300 = vmatpush1.msra.mxu0 %v286
    %301 = vmatprep.subr.mxu0 0.0
    %302 = vmatpush1.msra.mxu0 %v285
    %303 = vmatprep.subr.mxu0 0.0
    %304 = vmatpush1.msra.mxu0 %v284
    %305 = vmatprep.subr.mxu0 0.0
    %306 = vmatpush1.msra.mxu0 %v283
    %307 = vmatprep.subr.mxu0 0.0
    %308 = vmatpush1.msra.mxu0 %v282
    %309 = vmatprep.subr.mxu0 0.0
    %310 = vmatpush1.msra.mxu0 %v281
    %311 = vmatprep.subr.mxu0 0.0
    %312 = vmatpush1.msra.mxu0 %v280
    %313 = vmatprep.subr.mxu0 0.0
    %314 = vmatpush1.msra.mxu0 %v279
    %315 = vmatprep.subr.mxu0 0.0
    %316 = vmatpush1.msra.mxu0 %v278
    %317 = vmatprep.subr.mxu0 0.0
    %318 = vmatpush1.msra.mxu0 %v277
    %319 = vmatprep.subr.mxu0 0.0
    %320 = vmatpush1.msra.mxu0 %v276
    %321 = vmatprep.subr.mxu0 0.0
    %322 = vmatpush1.msra.mxu0 %v275
    %323 = vmatprep.subr.mxu0 0.0
    %324 = vmatpush2.msra.mxu0 0.0
    %325 = vmatprep.subr.mxu0 0.0
    %326 = vmatpush2.msra.mxu0 0.0
    %327 = vmatprep.subr.mxu0 0.0
    %328 = vmatpush2.msra.mxu0 0.0
    %329 = vmatprep.subr.mxu0 0.0
    %330 = vmatpush2.msra.mxu0 0.0
    %331 = vmatprep.subr.mxu0 0.0
    %332 = vmatpush2.msra.mxu0 0.0
    %333 = vmatprep.subr.mxu0 0.0
    %334 = vmatpush2.msra.mxu0 0.0
    %335 = vmatprep.subr.mxu0 0.0
    %336 = vmatpush2.msra.mxu0 0.0
    %337 = vmatprep.subr.mxu0 0.0
    %338 = vmatpush2.msra.mxu0 0.0
    %339 = vmatprep.subr.mxu0 0.0
    %340 = vmatpush2.msra.mxu0 0.0
    %341 = vmatprep.subr.mxu0 0.0
    %342 = vmatpush2.msra.mxu0 0.0
    %343 = vmatprep.subr.mxu0 0.0
    %344 = vmatpush2.msra.mxu0 0.0
    %345 = vmatprep.subr.mxu0 0.0
    %346 = vmatpush2.msra.mxu0 0.0
    %347 = vmatprep.subr.mxu0 0.0
    %348 = vmatpush2.msra.mxu0 0.0
    %349 = vmatprep.subr.mxu0 0.0
    %350 = vmatpush2.msra.mxu0 0.0
    %351 = vmatprep.subr.mxu0 0.0
    %352 = vmatpush2.msra.mxu0 0.0
    %353 = vmatprep.subr.mxu0 0.0
    %354 = vmatpush2.msra.mxu0 0.0
    %355 = vmatprep.mubr.f32.mxu0 0.0
    %356 = vmatmul.mubr.f32.gmra.mxu0 %v274
    %v357 = vpop.f32.mrf.mxu0
    %v358 = vadd.f32 0.0, %v357
    %v359 = vpop.f32.mrf.mxu0
    %360 = vdwg.mxu0
    %v361 = vxor.u32 %v358, 2147483648
    %v362 = vmul.f32 %v361, 1.442695
    %v363 = vpow.pop %v362
    %v364 = vadd.f32 %v363, 1.0
    %v365 = vrcp.pop %v364
    %v366 = vmul.f32 1.0, %v365
    %v367 = vld [vmem:[#allocation10] sm:$0xff]
    %v368 = vld [vmem:[#allocation10 + $0x8] sm:$0xff]
    %v369 = vld [vmem:[#allocation10 + $0x10] sm:$0xff]
    %v370 = vld [vmem:[#allocation10 + $0x18] sm:$0xff]
    %v371 = vld [vmem:[#allocation10 + $0x20] sm:$0xff]
    %v372 = vld [vmem:[#allocation10 + $0x28] sm:$0xff]
    %v373 = vld [vmem:[#allocation10 + $0x30] sm:$0xff]
    %v374 = vld [vmem:[#allocation10 + $0x38] sm:$0xff]
    %v375 = vld [vmem:[#allocation10 + $0x40] sm:$0xff]
    %v376 = vld [vmem:[#allocation10 + $0x48] sm:$0xff]
    %v377 = vld [vmem:[#allocation10 + $0x50] sm:$0xff]
    %v378 = vld [vmem:[#allocation10 + $0x58] sm:$0xff]
    %v379 = vld [vmem:[#allocation10 + $0x60] sm:$0xff]
    %v380 = vld [vmem:[#allocation10 + $0x68] sm:$0xff]
    %v381 = vld [vmem:[#allocation10 + $0x70] sm:$0xff]
    %v382 = vld [vmem:[#allocation10 + $0x78] sm:$0xff]
    %383 = vmatprep.subr.mxu0 0.0
    %384 = vmatpush1.msra.mxu0 %v382
    %385 = vmatprep.subr.mxu0 0.0
    %386 = vmatpush1.msra.mxu0 %v381
    %387 = vmatprep.subr.mxu0 0.0
    %388 = vmatpush1.msra.mxu0 %v380
    %389 = vmatprep.subr.mxu0 0.0
    %390 = vmatpush1.msra.mxu0 %v379
    %391 = vmatprep.subr.mxu0 0.0
    %392 = vmatpush1.msra.mxu0 %v378
    %393 = vmatprep.subr.mxu0 0.0
    %394 = vmatpush1.msra.mxu0 %v377
    %395 = vmatprep.subr.mxu0 0.0
    %396 = vmatpush1.msra.mxu0 %v376
    %397 = vmatprep.subr.mxu0 0.0
    %398 = vmatpush1.msra.mxu0 %v375
    %399 = vmatprep.subr.mxu0 0.0
    %400 = vmatpush1.msra.mxu0 %v374
    %401 = vmatprep.subr.mxu0 0.0
    %402 = vmatpush1.msra.mxu0 %v373
    %403 = vmatprep.subr.mxu0 0.0
    %404 = vmatpush1.msra.mxu0 %v372
    %405 = vmatprep.subr.mxu0 0.0
    %406 = vmatpush1.msra.mxu0 %v371
    %407 = vmatprep.subr.mxu0 0.0
    %408 = vmatpush1.msra.mxu0 %v370
    %409 = vmatprep.subr.mxu0 0.0
    %410 = vmatpush1.msra.mxu0 %v369
    %411 = vmatprep.subr.mxu0 0.0
    %412 = vmatpush1.msra.mxu0 %v368
    %413 = vmatprep.subr.mxu0 0.0
    %414 = vmatpush1.msra.mxu0 %v367
    %415 = vmatprep.subr.mxu0 0.0
    %416 = vmatpush2.msra.mxu0 0.0
    %417 = vmatprep.subr.mxu0 0.0
    %418 = vmatpush2.msra.mxu0 0.0
    %419 = vmatprep.subr.mxu0 0.0
    %420 = vmatpush2.msra.mxu0 0.0
    %421 = vmatprep.subr.mxu0 0.0
    %422 = vmatpush2.msra.mxu0 0.0
    %423 = vmatprep.subr.mxu0 0.0
    %424 = vmatpush2.msra.mxu0 0.0
    %425 = vmatprep.subr.mxu0 0.0
    %426 = vmatpush2.msra.mxu0 0.0
    %427 = vmatprep.subr.mxu0 0.0
    %428 = vmatpush2.msra.mxu0 0.0
    %429 = vmatprep.subr.mxu0 0.0
    %430 = vmatpush2.msra.mxu0 0.0
    %431 = vmatprep.subr.mxu0 0.0
    %432 = vmatpush2.msra.mxu0 0.0
    %433 = vmatprep.subr.mxu0 0.0
    %434 = vmatpush2.msra.mxu0 0.0
    %435 = vmatprep.subr.mxu0 0.0
    %436 = vmatpush2.msra.mxu0 0.0
    %437 = vmatprep.subr.mxu0 0.0
    %438 = vmatpush2.msra.mxu0 0.0
    %439 = vmatprep.subr.mxu0 0.0
    %440 = vmatpush2.msra.mxu0 0.0
    %441 = vmatprep.subr.mxu0 0.0
    %442 = vmatpush2.msra.mxu0 0.0
    %443 = vmatprep.subr.mxu0 0.0
    %444 = vmatpush2.msra.mxu0 0.0
    %445 = vmatprep.subr.mxu0 0.0
    %446 = vmatpush2.msra.mxu0 0.0
    %447 = vmatprep.mubr.f32.mxu0 0.0
    %448 = vmatmul.mubr.f32.gmra.mxu0 %v366
    %v449 = vpop.f32.mrf.mxu0
    %v450 = vadd.f32 0.0, %v449
    %v451 = vpop.f32.mrf.mxu0
    %452 = vdwg.mxu0
    %v453 = vxor.u32 %v450, 2147483648
    %v454 = vmul.f32 %v453, 1.442695
    %v455 = vpow.pop %v454
    %v456 = vadd.f32 %v455, 1.0
    %v457 = vrcp.pop %v456
    %v458 = vmul.f32 1.0, %v457
    %459 = vst [vmem:[#allocation11] sm:$0xff] %v274
    %460 = vst [vmem:[#allocation12] sm:$0xff] %v458
    // Predicated region
    $region42: #{tpu_custom_call.1} parent=1 // pred_check
      _
    $region43: #{tpu_custom_call.1} parent=1 // pred_check_branch
      %462 = sbr.rel (0) target = $region45
    $region44: #{tpu_custom_call.1} parent=1 // pred_region
      %s464 = ssub.s32 128, 128
      %465 = vsyncadd [#allocation4], %s464
      %s467 = sshll.u32 [#allocation11], 4
      %s468 = int_to_ptr.vmem [resolvable:$true] %s467
      %470 = dma.vmem_to_hbm [thread:$0]  %s468, 128, %s5, [#allocation4]
    $region45: #{tpu_custom_call.1} parent=1 // pred_fallthru
      _
    // Predicated region
    $region46: #{tpu_custom_call.1} parent=1 // pred_check
      _
    $region47: #{tpu_custom_call.1} parent=1 // pred_check_branch
      %472 = sbr.rel (0) target = $region49
    $region48: #{tpu_custom_call.1} parent=1 // pred_region
      %s474 = ssub.s32 128, 128
      %475 = vsyncadd [#allocation13], %s474
      %s477 = sshll.u32 [#allocation12], 4
      %s478 = int_to_ptr.vmem [resolvable:$true] %s477
      %480 = dma.vmem_to_hbm [thread:$0]  %s478, 128, %s6, [#allocation13]
    $region49: #{tpu_custom_call.1} parent=1 // pred_fallthru
      _
    // Predicated region
    $region50: #{tpu_custom_call.1} parent=1 // pred_check
      _
    $region51: #{tpu_custom_call.1} parent=1 // pred_check_branch
      %482 = sbr.rel (0) target = $region53
    $region52: #{tpu_custom_call.1} parent=1 // pred_region
      %483 = dma.done [#allocation4], 128
    $region53: #{tpu_custom_call.1} parent=1 // pred_fallthru
      _
    // Predicated region
    $region54: #{tpu_custom_call.1} parent=1 // pred_check
      _
    $region55: #{tpu_custom_call.1} parent=1 // pred_check_branch
      %485 = sbr.rel (0) target = $region57
    $region56: #{tpu_custom_call.1} parent=1 // pred_region
      %486 = dma.done [#allocation13], 128
    $region57: #{tpu_custom_call.1} parent=1 // pred_fallthru
      _
    %487 = vsyncpa [#allocation3], 1
    %488 = vsyncpa [#allocation6], 1
    %489 = vsyncpa [#allocation9], 1
    %490 = vsyncpa [#allocation4], 1
    %491 = vsyncpa [#allocation13], 1

</llo_original>
